<compile_context>
chip_gen: v5e
topology: v5e:2x2
jax: 0.10.0
libtpu: 0.0.40
codegen_flags: <defaults>
</compile_context>

<pallas_src>
import functools

import jax
import jax.numpy as jnp
from jax.experimental import pallas as pl
from jax.experimental.pallas import tpu as pltpu

_MIB = 1 << 20


def _softplus_f32(x_f32):
    # Numerically stable softplus: max(x,0) + log1p(exp(-|x|)).
    return jnp.maximum(x_f32, 0.0) + jnp.log1p(jnp.exp(-jnp.abs(x_f32)))


def _sigma_only_kernel(x_ref, o_ref, *, min_sigma):
    # Block covers only the sigma columns [n, 2n); mean half stays in the
    # aliased HBM buffer and never enters VMEM.
    xs = x_ref[...].astype(jnp.float32)
    o_ref[...] = (_softplus_f32(xs) + min_sigma).astype(o_ref.dtype)


def _split_kernel(x_ref, o_ref, *, n_features, min_sigma):
    # Full-width block, lane-aligned static split (non-aliased path).
    o_ref[:, :n_features] = x_ref[:, :n_features]
    xs = x_ref[:, n_features:].astype(jnp.float32)
    o_ref[:, n_features:] = (_softplus_f32(xs) + min_sigma).astype(o_ref.dtype)


def _where_kernel(x_ref, o_ref, *, n_features, min_sigma):
    # Fallback when the mean/sigma split is not on a 128-lane boundary.
    x = x_ref[...]
    col = jax.lax.broadcasted_iota(jnp.int32, x.shape, dimension=1)
    sigma = (_softplus_f32(x.astype(jnp.float32)) + min_sigma).astype(x.dtype)
    o_ref[...] = jnp.where(col < n_features, x, sigma)


def _round_up(v, m):
    return ((v + m - 1) // m) * m


def _vmem_capacity_bytes():
    try:
        return int(pltpu.get_tpu_info().vmem_capacity_bytes)
    except Exception:
        return 64 * _MIB  # conservative default (v7x per-TensorCore)


def _pick_block_rows(batch, block_cols, itemsize, row_mult):
    """Batch-tile rows from a chip-aware VMEM budget, >= 2 grid steps if possible."""
    if batch <= row_mult:
        return batch  # single full-extent block (always legal)
    vmem_cap = _vmem_capacity_bytes()
    # in + out, double-buffered -> 4 live buffers of (rows, block_cols).
    total_budget = min(16 * _MIB, vmem_cap // 5)
    per_buffer = total_budget // 4
    rows = max(row_mult, per_buffer // max(1, block_cols * itemsize))
    rows = min(rows, _round_up(batch, row_mult))
    rows = max(row_mult, (rows // row_mult) * row_mult)
    # v7x has 2 TensorCores sharing the "parallel" grid axis: keep >= 2 steps.
    if pl.cdiv(batch, rows) < 2:
        rows = _round_up(pl.cdiv(batch, 2), row_mult)
    return rows


def softplus_sigma(x, min_sigma=0.001, *, alias_input=True):
    """x: (batch, features), features even. Returns same shape/dtype.

    With alias_input=True and a lane-aligned split (n % 128 == 0) the output
    aliases the input buffer and only the sigma half is read/written
    (~2x less HBM traffic when the caller donates x; correct either way).
    """
    B, F = x.shape
    assert F % 2 == 0, "feature dim must be even"
    n = F // 2
    itemsize = jnp.dtype(x.dtype).itemsize
    row_mult = max(8, 32 // itemsize)  # 8 f32, 16 bf16, 32 int8/fp8

    aligned = (n % 128 == 0)
    use_alias = alias_input and aligned

    block_cols = n if use_alias else F
    TB = _pick_block_rows(B, block_cols, itemsize, row_mult)
    grid = (pl.cdiv(B, TB),)

    block_bytes = TB * block_cols * itemsize
    vmem_limit = max(8 * _MIB, int(4 * block_bytes * 1.2) + 2 * _MIB)
    compiler_params = pltpu.CompilerParams(
        dimension_semantics=("parallel",),
        vmem_limit_bytes=vmem_limit,
    )

    if use_alias:
        return pl.pallas_call(
            functools.partial(_sigma_only_kernel, min_sigma=min_sigma),
            out_shape=jax.ShapeDtypeStruct((B, F), x.dtype),
            grid=grid,
            in_specs=[pl.BlockSpec((TB, n), lambda i: (i, 1))],
            out_specs=pl.BlockSpec((TB, n), lambda i: (i, 1)),
            input_output_aliases={0: 0},
            compiler_params=compiler_params,
        )(x)

    if aligned:
        body = functools.partial(_split_kernel, n_features=n, min_sigma=min_sigma)
    else:
        body = functools.partial(_where_kernel, n_features=n, min_sigma=min_sigma)

    return pl.pallas_call(
        body,
        out_shape=jax.ShapeDtypeStruct((B, F), x.dtype),
        grid=grid,
        in_specs=[pl.BlockSpec((TB, F), lambda i: (i, 0))],
        out_specs=pl.BlockSpec((TB, F), lambda i: (i, 0)),
        compiler_params=compiler_params,
    )(x)


def _reference(x, min_sigma=0.001):
    n = x.shape[-1] // 2
    mean = x[:, :n].astype(jnp.float32)
    sigma = min_sigma + jax.nn.softplus(x[:, n:].astype(jnp.float32))
    return jnp.concatenate([mean, sigma], axis=-1).astype(x.dtype)


if __name__ == "__main__":
    key = jax.random.PRNGKey(0)
    min_sigma = 0.001

    # 1) Small, lane-aligned split (n=128): aliased sigma-only path.
    x1 = jax.random.normal(key, (8, 256), dtype=jnp.float32) * 3.0
    out1 = jax.block_until_ready(softplus_sigma(x1, min_sigma))
    assert out1.shape == x1.shape and out1.dtype == x1.dtype
    assert jnp.max(jnp.abs(out1 - _reference(x1, min_sigma))) < 1e-5, "aliased path mismatch"

    # 2) Same shape, non-aliased full-width split kernel.
    out1b = jax.block_until_ready(softplus_sigma(x1, min_sigma, alias_input=False))
    assert jnp.max(jnp.abs(out1b - _reference(x1, min_sigma))) < 1e-5, "split path mismatch"

    # 3) Aliased path with multiple grid steps and a partial final block.
    x2 = jax.random.normal(jax.random.PRNGKey(1), (1000, 256), dtype=jnp.float32)
    out2 = jax.block_until_ready(softplus_sigma(x2, min_sigma))
    assert jnp.max(jnp.abs(out2 - _reference(x2, min_sigma))) < 1e-5, "tiled aliased mismatch"

    # 4) Non-lane-aligned split (n=32): where-fallback path, >=2 grid steps.
    x3 = jax.random.normal(jax.random.PRNGKey(2), (16, 64), dtype=jnp.float32)
    out3 = jax.block_until_ready(softplus_sigma(x3, min_sigma))
    assert jnp.max(jnp.abs(out3 - _reference(x3, min_sigma))) < 1e-5, "fallback mismatch"

    # 5) bf16 quick check (single full block; sigma math in f32 inside kernel).
    x4 = (jax.random.normal(jax.random.PRNGKey(3), (8, 256), dtype=jnp.float32)).astype(jnp.bfloat16)
    out4 = jax.block_until_ready(softplus_sigma(x4, min_sigma))
    err4 = jnp.max(jnp.abs(out4.astype(jnp.float32) - _reference(x4, min_sigma).astype(jnp.float32)))
    assert err4 < 2e-2, "bf16 mismatch"

    print("KERNEL_OK")
</pallas_src>

<mosaic_0001>
module attributes {stable_mosaic.version = 11 : i64} {
  func.func @_sigma_only_kernel(%arg0: i32, %arg1: memref<8x128xf32, #tpu.memory_space<vmem>>, %arg2: memref<8x128xf32, #tpu.memory_space<vmem>>) attributes {dimension_semantics = [#tpu.dimension_semantics<parallel>], iteration_bounds = array<i64: 1>, scalar_prefetch = 0 : i64, scratch_operands = 0 : i64, tpu.core_type = #tpu.core_type<tc>, window_params = [{transform_indices = @transform_0, window_bounds = array<i64: 8, 128>}, {transform_indices = @transform_1, window_bounds = array<i64: 8, 128>}]} {
    %c0 = arith.constant 0 : index
    %c0_0 = arith.constant 0 : index
    %0 = vector.load %arg1[%c0, %c0_0] : memref<8x128xf32, #tpu.memory_space<vmem>>, vector<8x128xf32>
    %cst = arith.constant 0.000000e+00 : f32
    %1 = vector.broadcast %cst : f32 to vector<8x128xf32>
    %2 = arith.maximumf %0, %1 : vector<8x128xf32>
    %3 = math.absf %0 : vector<8x128xf32>
    %cst_1 = arith.constant 0.000000e+00 : f32
    %4 = vector.broadcast %cst_1 : f32 to vector<8x128xf32>
    %5 = arith.subf %4, %3 : vector<8x128xf32>
    %6 = math.exp %5 : vector<8x128xf32>
    %7 = math.log1p %6 : vector<8x128xf32>
    %8 = arith.addf %2, %7 : vector<8x128xf32>
    %cst_2 = arith.constant 1.000000e-03 : f32
    %9 = vector.broadcast %cst_2 : f32 to vector<8x128xf32>
    %10 = arith.addf %8, %9 : vector<8x128xf32>
    %c0_3 = arith.constant 0 : index
    %c0_4 = arith.constant 0 : index
    %11 = vector.load %arg2[%c0_3, %c0_4] : memref<8x128xf32, #tpu.memory_space<vmem>>, vector<8x128xf32>
    tpu.vector_store %arg2[%c0_3, %c0_4], %10 {strides = array<i32>} : memref<8x128xf32, #tpu.memory_space<vmem>>, vector<8x128xf32>,
    return
  }
  func.func @transform_0(%arg0: i32) -> (i32, i32) {
    %c1_i32 = arith.constant 1 : i32
    %c0_i32 = arith.constant 0 : i32
    return %arg0, %c1_i32 : i32, i32
  }
  func.func @transform_1(%arg0: i32) -> (i32, i32) {
    %c1_i32 = arith.constant 1 : i32
    %c0_i32 = arith.constant 0 : i32
    return %arg0, %c1_i32 : i32, i32
  }
}

</mosaic_0001>

<llo_original>
// kernel: tpu_custom_call.1
$region0: #{tpu_custom_call.1}
  #allocation0 [shape = 'u32[]', space=smem, size = 0x4, offset = 0x4, fixed_abs, tag = 'smem constant byte address 0x4 - core index']
  #allocation1 [shape = 'u32[72,128]{1,0:T(1,128)}', space=vmem, size = 0x9000, scoped, tag = 'internal scratch']
  %s0 = inlined_call_operand.hbm [shape: f32[8,256], index: 0, kind: input, shape index: {}, may-alias: {0,1}]
  %s1 = inlined_call_operand.hbm [shape: f32[8,256], index: 1, kind: output, shape index: {}, may-alias: {0,1}]
  %s2 = sld [smem:[#allocation0]]
  $region18: #{tpu_custom_call.1} parent=0
    _
  %s4 = ssub.s32 1, %s2
  %s5 = scalar_select 0, %s4, %s2
  $region1: #{tpu_custom_call.1} parent=0
    #allocation2 [shape = 'u8[4096]{0}', space=vmem, size = 0x1000, scoped, tag = 'input window, operand 0, single buffered']
    #allocation3 [shape = 's32[1]{0}', space=sflag, size = 0x4, scoped, tag = 'scoped memory for tpu_custom_call.1']
    #allocation4 [shape = 's32[1]{0}', space=sflag, size = 0x4, scoped, tag = 'scoped memory for tpu_custom_call.1']
    #allocation5 [shape = 'u8[4096]{0}', space=vmem, size = 0x1000, scoped, tag = 'output window, operand 0, single buffered']
    %6 = vsyncpa [#allocation3], 0
    %7 = vsyncpa [#allocation4], 0
    // Predicated region
    $region2: #{tpu_custom_call.1} parent=1 // pred_check
      _
    $region3: #{tpu_custom_call.1} parent=1 // pred_check_branch
      %9 = sbr.rel (0) target = $region5
    $region4: #{tpu_custom_call.1} parent=1 // pred_region
      %11 = vsyncadd [#allocation3], 0
      %s12 = scalar_lea.hbm %s0, 8
      %s14 = sshll.u32 %s12, 4
      %s15 = int_to_ptr.hbm [resolvable:$true] %s14
      %s16 = sshll.u32 [#allocation2], 4
      %s17 = int_to_ptr.vmem [resolvable:$true] %s16
      %19 = dma.hbm_to_vmem [thread:$0]  %s15, 128, %s17, [#allocation3]
    $region5: #{tpu_custom_call.1} parent=1 // pred_fallthru
      _
    // Predicated region
    $region6: #{tpu_custom_call.1} parent=1 // pred_check
      _
    $region7: #{tpu_custom_call.1} parent=1 // pred_check_branch
      %21 = sbr.rel (0) target = $region9
    $region8: #{tpu_custom_call.1} parent=1 // pred_region
      %23 = dma.done [#allocation3], 128
    $region9: #{tpu_custom_call.1} parent=1 // pred_fallthru
      _
    %v24 = vld [vmem:[#allocation2] sm:$0xff]
    %v25 = vmax.f32 %v24, 0.0
    %v26 = vand.u32 2147483647, %v24
    %v27 = vsub.f32 0.0, %v26
    %v28 = vmul.f32 %v27, 1.442695
    %v29 = vpow.pop %v28
    %v30 = vadd.f32 %v29, 1.0
    %v31 = vlog2.pop %v30
    %v32 = vmul.f32 %v31, 0.6931472
    %v33 = vmul.f32 -0.5, %v29
    %v34 = vadd.f32 %v33, 1.0
    %v35 = vmul.f32 %v34, %v29
    %v36 = vand.u32 2147483647, %v29
    %vm37 = vcmp.lt.f32.partialorder %v36, 0.0004427343
    %v38 = vsel %vm37, %v35, %v32
    %v39 = vadd.f32 %v25, %v38
    %v40 = vadd.f32 %v39, 0.001
    %41 = vst [vmem:[#allocation5] sm:$0xff] %v40
    // Predicated region
    $region10: #{tpu_custom_call.1} parent=1 // pred_check
      _
    $region11: #{tpu_custom_call.1} parent=1 // pred_check_branch
      %43 = sbr.rel (0) target = $region13
    $region12: #{tpu_custom_call.1} parent=1 // pred_region
      %45 = vsyncadd [#allocation4], 0
      %s46 = scalar_lea.hbm %s1, 8
      %s48 = sshll.u32 [#allocation5], 4
      %s49 = int_to_ptr.vmem [resolvable:$true] %s48
      %s50 = sshll.u32 %s46, 4
      %s51 = int_to_ptr.hbm [resolvable:$true] %s50
      %53 = dma.vmem_to_hbm [thread:$0]  %s49, 128, %s51, [#allocation4]
    $region13: #{tpu_custom_call.1} parent=1 // pred_fallthru
      _
    // Predicated region
    $region14: #{tpu_custom_call.1} parent=1 // pred_check
      _
    $region15: #{tpu_custom_call.1} parent=1 // pred_check_branch
      %55 = sbr.rel (0) target = $region17
    $region16: #{tpu_custom_call.1} parent=1 // pred_region
      %57 = dma.done [#allocation4], 128
    $region17: #{tpu_custom_call.1} parent=1 // pred_fallthru
      _
    %58 = vsyncpa [#allocation3], 1
    %59 = vsyncpa [#allocation4], 1

</llo_original>
